<compile_context>
chip_gen: v7x
topology: tpu7x:2x2x1
jax: 0.10.0
libtpu: 0.0.40
codegen_flags: <defaults>
</compile_context>

<pallas_src>
import functools

import jax
import jax.numpy as jnp
from jax import lax
from jax.experimental import pallas as pl
from jax.experimental.pallas import tpu as pltpu

_LANES = 128
_MAX_ROWS_PER_BLOCK = 1024  # (1024,128) f32 block = 512 KiB per input per buffer


def _value_loss_kernel(piv_ref, pred_ref, targ_ref, out_ref, acc_ref,
                       *, n, tr, nblocks, has_tail):
    """Accumulates sufficient statistics over one (tr, 128) row block.

    acc_ref (SMEM f32[10]):
      [0] sum (p-t)^2   [1] sum (p-a)   [2] sum (t-b)
      [3] sum (p-a)^2   [4] sum (t-b)^2 [5] sum (p-a)(t-b)
      [6] min p  [7] min t  [8] max p  [9] max t
    piv_ref (SMEM f32[2]): pivots a = pred.flat[0], b = targ.flat[0].
    """
    i = pl.program_id(0)

    @pl.when(i == 0)
    def _init():
        for k in range(6):
            acc_ref[k] = jnp.float32(0.0)
        acc_ref[6] = jnp.float32(jnp.inf)
        acc_ref[7] = jnp.float32(jnp.inf)
        acc_ref[8] = jnp.float32(-jnp.inf)
        acc_ref[9] = jnp.float32(-jnp.inf)

    a = piv_ref[0]
    b = piv_ref[1]

    # In-kernel cast: HBM traffic stays at the source dtype.
    p = pred_ref[...].astype(jnp.float32)
    t = targ_ref[...].astype(jnp.float32)

    def accumulate(valid):
        if valid is None:                           # interior block: no masking
            d = p - t
            cp = p - a
            ct = t - b
            p_min, t_min, p_max, t_max = p, t, p, t
        else:                                       # tail block: mask everything
            d = jnp.where(valid, p - t, 0.0)
            cp = jnp.where(valid, p - a, 0.0)
            ct = jnp.where(valid, t - b, 0.0)
            p_min = jnp.where(valid, p, jnp.inf)
            t_min = jnp.where(valid, t, jnp.inf)
            p_max = jnp.where(valid, p, -jnp.inf)
            t_max = jnp.where(valid, t, -jnp.inf)
        acc_ref[0] += jnp.sum(d * d)
        acc_ref[1] += jnp.sum(cp)
        acc_ref[2] += jnp.sum(ct)
        acc_ref[3] += jnp.sum(cp * cp)
        acc_ref[4] += jnp.sum(ct * ct)
        acc_ref[5] += jnp.sum(cp * ct)
        acc_ref[6] = jnp.minimum(acc_ref[6], jnp.min(p_min))
        acc_ref[7] = jnp.minimum(acc_ref[7], jnp.min(t_min))
        acc_ref[8] = jnp.maximum(acc_ref[8], jnp.max(p_max))
        acc_ref[9] = jnp.maximum(acc_ref[9], jnp.max(t_max))

    if not has_tail:
        # Statically lane/block-aligned: no iota/where anywhere.
        accumulate(None)
    else:
        last = nblocks - 1
        if nblocks > 1:
            @pl.when(i != last)
            def _interior():
                accumulate(None)

        @pl.when(i == last)
        def _tail():
            base = i * (tr * _LANES)
            flat_idx = (base
                        + lax.broadcasted_iota(jnp.int32, (tr, _LANES), 0) * _LANES
                        + lax.broadcasted_iota(jnp.int32, (tr, _LANES), 1))
            accumulate(flat_idx < n)

    @pl.when(i == nblocks - 1)
    def _finalize():
        inv_n = jnp.float32(1.0 / n)
        s_dd = acc_ref[0]
        s_cp, s_ct = acc_ref[1], acc_ref[2]
        s_cpp, s_ctt, s_cpt = acc_ref[3], acc_ref[4], acc_ref[5]

        # corr = cov / sqrt(var_p * var_t) on pivot-centered moments.
        # NOTE: like np.corrcoef, nan/inf if either input is constant.
        var_p = s_cpp - s_cp * s_cp * inv_n
        var_t = s_ctt - s_ct * s_ct * inv_n
        cov = s_cpt - s_cp * s_ct * inv_n
        corr = cov * lax.rsqrt(var_p * var_t)      # rsqrt -> EUP, essentially free

        # out: [loss, mean_pred, mean_targ, min_pred, min_targ,
        #       max_pred, max_targ, corr]
        out_ref[0] = s_dd * inv_n
        out_ref[1] = a + s_cp * inv_n
        out_ref[2] = b + s_ct * inv_n
        out_ref[3] = acc_ref[6]
        out_ref[4] = acc_ref[7]
        out_ref[5] = acc_ref[8]
        out_ref[6] = acc_ref[9]
        out_ref[7] = corr


def value_loss(pred, targ):
    """Returns (loss, info) matching ValueLoss.forward semantics (ValueL2)."""
    assert pred.shape == targ.shape, (pred.shape, targ.shape)
    n = int(pred.size)
    assert n > 0, "ValueLoss: empty input"
    B = pred.shape[0]

    rows = (n + _LANES - 1) // _LANES

    def _prep(x):
        x = x.reshape(-1)                          # free for the (B, 1) value head
        if rows * _LANES != n:                     # pad only the partial lane-row
            x = jnp.pad(x, (0, rows * _LANES - n))
        return x.reshape(rows, _LANES)

    pred2d = _prep(pred)
    targ2d = _prep(targ)

    # Pivots (first element of each input) for numerically-stable correlation.
    piv = jnp.stack([pred2d[0, 0], targ2d[0, 0]]).astype(jnp.float32)

    if rows <= _MAX_ROWS_PER_BLOCK:
        tr, nblocks = rows, 1
    else:
        tr = _MAX_ROWS_PER_BLOCK
        nblocks = (rows + tr - 1) // tr
    has_tail = n < nblocks * tr * _LANES           # static

    kernel = functools.partial(_value_loss_kernel,
                               n=n, tr=tr, nblocks=nblocks, has_tail=has_tail)

    stats = pl.pallas_call(
        kernel,
        out_shape=jax.ShapeDtypeStruct((8,), jnp.float32),
        grid=(nblocks,),
        in_specs=[
            pl.BlockSpec(memory_space=pltpu.SMEM),            # pivots
            pl.BlockSpec((tr, _LANES), lambda i: (i, 0)),      # pred rows
            pl.BlockSpec((tr, _LANES), lambda i: (i, 0)),      # targ rows
        ],
        out_specs=pl.BlockSpec(memory_space=pltpu.SMEM),
        scratch_shapes=[pltpu.SMEM((10,), jnp.float32)],
        compiler_params=pltpu.CompilerParams(
            dimension_semantics=("arbitrary",)),
    )(piv, pred2d, targ2d)

    loss = stats[0]
    # len(pred) > 1 is a static shape check, done in the wrapper.
    corr = stats[7] if B > 1 else jnp.float32(jnp.nan)
    info = {
        "mean_pred": stats[1],
        "mean_targ": stats[2],
        "min_pred": stats[3],
        "min_targ": stats[4],
        "max_pred": stats[5],
        "max_targ": stats[6],
        "corr": corr,
    }
    return loss, info


if __name__ == "__main__":
    key = jax.random.PRNGKey(0)

    # Exercise: partial lane-row (B=32), exactly aligned (B=128, no mask path),
    # multi-row with tail (B=300).  Offset means stress the corr numerics.
    for B in (32, 128, 300):
        k1, k2 = jax.random.split(jax.random.fold_in(key, B))
        pred = jax.random.normal(k1, (B, 1), dtype=jnp.float32) * 2.0 + 5.0
        targ = pred + 0.5 * jax.random.normal(k2, (B, 1), dtype=jnp.float32)

        loss, info = value_loss(pred, targ)
        jax.block_until_ready(loss)
        for v in info.values():
            jax.block_until_ready(v)

        # pure-JAX reference
        ref_loss = jnp.mean((pred - targ) ** 2)
        p = pred.reshape(-1)
        t = targ.reshape(-1)
        ref_corr = jnp.corrcoef(jnp.stack([p, t]))[0, 1]

        assert jnp.allclose(loss, ref_loss, rtol=1e-5, atol=1e-5), (B, loss, ref_loss)
        assert jnp.allclose(info["corr"], ref_corr, atol=2e-4), (B, info["corr"], ref_corr)
        assert jnp.allclose(info["mean_pred"], pred.mean(), atol=1e-4)
        assert jnp.allclose(info["mean_targ"], targ.mean(), atol=1e-4)
        assert jnp.allclose(info["min_pred"], pred.min(), atol=1e-5)
        assert jnp.allclose(info["min_targ"], targ.min(), atol=1e-5)
        assert jnp.allclose(info["max_pred"], pred.max(), atol=1e-5)
        assert jnp.allclose(info["max_targ"], targ.max(), atol=1e-5)

    print("KERNEL_OK")
</pallas_src>

<mosaic_0001>
module attributes {stable_mosaic.version = 11 : i64} {
  func.func @_value_loss_kernel(%arg0: i32, %arg1: memref<2xf32, #tpu.memory_space<smem>>, %arg2: memref<1x128xf32, #tpu.memory_space<vmem>>, %arg3: memref<1x128xf32, #tpu.memory_space<vmem>>, %arg4: memref<8xf32, #tpu.memory_space<smem>>, %arg5: memref<10xf32, #tpu.memory_space<smem>>) attributes {dimension_semantics = [#tpu.dimension_semantics<arbitrary>], iteration_bounds = array<i64: 1>, scalar_prefetch = 0 : i64, scratch_operands = 1 : i64, tpu.core_type = #tpu.core_type<tc>, window_params = [{transform_indices = @transform_0, window_bounds = array<i64: 2>}, {transform_indices = @transform_1, window_bounds = array<i64: 1, 128>}, {transform_indices = @transform_2, window_bounds = array<i64: 1, 128>}, {transform_indices = @transform_3, window_bounds = array<i64: 8>}]} {
    %c0_i32 = arith.constant 0 : i32
    %0 = arith.cmpi eq, %arg0, %c0_i32 : i32
    %1 = arith.extui %0 : i1 to i32
    %c0_i32_0 = arith.constant 0 : i32
    %2 = arith.cmpi ne, %1, %c0_i32_0 : i32
    scf.if %2 {
      %cst = arith.constant 0.000000e+00 : f32
      %c0_9 = arith.constant 0 : index
      %13 = memref.load %arg5[%c0_9] : memref<10xf32, #tpu.memory_space<smem>>
      memref.store %cst, %arg5[%c0_9] : memref<10xf32, #tpu.memory_space<smem>>
      %cst_10 = arith.constant 0.000000e+00 : f32
      %c1_11 = arith.constant 1 : index
      %14 = memref.load %arg5[%c1_11] : memref<10xf32, #tpu.memory_space<smem>>
      memref.store %cst_10, %arg5[%c1_11] : memref<10xf32, #tpu.memory_space<smem>>
      %cst_12 = arith.constant 0.000000e+00 : f32
      %c2 = arith.constant 2 : index
      %15 = memref.load %arg5[%c2] : memref<10xf32, #tpu.memory_space<smem>>
      memref.store %cst_12, %arg5[%c2] : memref<10xf32, #tpu.memory_space<smem>>
      %cst_13 = arith.constant 0.000000e+00 : f32
      %c3 = arith.constant 3 : index
      %16 = memref.load %arg5[%c3] : memref<10xf32, #tpu.memory_space<smem>>
      memref.store %cst_13, %arg5[%c3] : memref<10xf32, #tpu.memory_space<smem>>
      %cst_14 = arith.constant 0.000000e+00 : f32
      %c4 = arith.constant 4 : index
      %17 = memref.load %arg5[%c4] : memref<10xf32, #tpu.memory_space<smem>>
      memref.store %cst_14, %arg5[%c4] : memref<10xf32, #tpu.memory_space<smem>>
      %cst_15 = arith.constant 0.000000e+00 : f32
      %c5 = arith.constant 5 : index
      %18 = memref.load %arg5[%c5] : memref<10xf32, #tpu.memory_space<smem>>
      memref.store %cst_15, %arg5[%c5] : memref<10xf32, #tpu.memory_space<smem>>
      %cst_16 = arith.constant 0x7F800000 : f32
      %c6 = arith.constant 6 : index
      %19 = memref.load %arg5[%c6] : memref<10xf32, #tpu.memory_space<smem>>
      memref.store %cst_16, %arg5[%c6] : memref<10xf32, #tpu.memory_space<smem>>
      %cst_17 = arith.constant 0x7F800000 : f32
      %c7 = arith.constant 7 : index
      %20 = memref.load %arg5[%c7] : memref<10xf32, #tpu.memory_space<smem>>
      memref.store %cst_17, %arg5[%c7] : memref<10xf32, #tpu.memory_space<smem>>
      %cst_18 = arith.constant 0xFF800000 : f32
      %c8 = arith.constant 8 : index
      %21 = memref.load %arg5[%c8] : memref<10xf32, #tpu.memory_space<smem>>
      memref.store %cst_18, %arg5[%c8] : memref<10xf32, #tpu.memory_space<smem>>
      %cst_19 = arith.constant 0xFF800000 : f32
      %c9 = arith.constant 9 : index
      %22 = memref.load %arg5[%c9] : memref<10xf32, #tpu.memory_space<smem>>
      memref.store %cst_19, %arg5[%c9] : memref<10xf32, #tpu.memory_space<smem>>
    } else {
    }
    %c0 = arith.constant 0 : index
    %3 = memref.load %arg1[%c0] : memref<2xf32, #tpu.memory_space<smem>>
    %c1 = arith.constant 1 : index
    %4 = memref.load %arg1[%c1] : memref<2xf32, #tpu.memory_space<smem>>
    %c0_1 = arith.constant 0 : index
    %c0_2 = arith.constant 0 : index
    %5 = vector.load %arg2[%c0_1, %c0_2] : memref<1x128xf32, #tpu.memory_space<vmem>>, vector<1x128xf32>
    %c0_3 = arith.constant 0 : index
    %c0_4 = arith.constant 0 : index
    %6 = vector.load %arg3[%c0_3, %c0_4] : memref<1x128xf32, #tpu.memory_space<vmem>>, vector<1x128xf32>
    %c0_i32_5 = arith.constant 0 : i32
    %7 = arith.cmpi eq, %arg0, %c0_i32_5 : i32
    %8 = arith.extui %7 : i1 to i32
    %c0_i32_6 = arith.constant 0 : i32
    %9 = arith.cmpi ne, %8, %c0_i32_6 : i32
    scf.if %9 {
      %c128_i32 = arith.constant 128 : i32
      %13 = arith.muli %arg0, %c128_i32 : i32
      %14 = tpu.iota {dimensions = array<i32: 0>} : vector<1x128xi32>
      %c128_i32_9 = arith.constant 128 : i32
      %15 = vector.broadcast %c128_i32_9 : i32 to vector<1x128xi32>
      %16 = arith.muli %14, %15 : vector<1x128xi32>
      %17 = vector.broadcast %13 : i32 to vector<1x128xi32>
      %18 = arith.addi %17, %16 : vector<1x128xi32>
      %19 = tpu.iota {dimensions = array<i32: 1>} : vector<1x128xi32>
      %20 = arith.addi %18, %19 : vector<1x128xi32>
      %c32_i32 = arith.constant 32 : i32
      %21 = vector.broadcast %c32_i32 : i32 to vector<1x128xi32>
      %22 = arith.cmpi slt, %20, %21 : vector<1x128xi32>
      %23 = arith.subf %5, %6 : vector<1x128xf32>
      %cst = arith.constant 0.000000e+00 : f32
      %24 = vector.broadcast %cst : f32 to vector<1x128xf32>
      %25 = arith.select %22, %23, %24 : vector<1x128xi1>, vector<1x128xf32>
      %26 = vector.broadcast %3 : f32 to vector<1x128xf32>
      %27 = arith.subf %5, %26 : vector<1x128xf32>
      %cst_10 = arith.constant 0.000000e+00 : f32
      %28 = vector.broadcast %cst_10 : f32 to vector<1x128xf32>
      %29 = arith.select %22, %27, %28 : vector<1x128xi1>, vector<1x128xf32>
      %30 = vector.broadcast %4 : f32 to vector<1x128xf32>
      %31 = arith.subf %6, %30 : vector<1x128xf32>
      %cst_11 = arith.constant 0.000000e+00 : f32
      %32 = vector.broadcast %cst_11 : f32 to vector<1x128xf32>
      %33 = arith.select %22, %31, %32 : vector<1x128xi1>, vector<1x128xf32>
      %cst_12 = arith.constant 0x7F800000 : f32
      %34 = vector.broadcast %cst_12 : f32 to vector<1x128xf32>
      %35 = arith.select %22, %5, %34 : vector<1x128xi1>, vector<1x128xf32>
      %cst_13 = arith.constant 0x7F800000 : f32
      %36 = vector.broadcast %cst_13 : f32 to vector<1x128xf32>
      %37 = arith.select %22, %6, %36 : vector<1x128xi1>, vector<1x128xf32>
      %cst_14 = arith.constant 0xFF800000 : f32
      %38 = vector.broadcast %cst_14 : f32 to vector<1x128xf32>
      %39 = arith.select %22, %5, %38 : vector<1x128xi1>, vector<1x128xf32>
      %cst_15 = arith.constant 0xFF800000 : f32
      %40 = vector.broadcast %cst_15 : f32 to vector<1x128xf32>
      %41 = arith.select %22, %6, %40 : vector<1x128xi1>, vector<1x128xf32>
      %c0_16 = arith.constant 0 : index
      %42 = memref.load %arg5[%c0_16] : memref<10xf32, #tpu.memory_space<smem>>
      %43 = arith.mulf %25, %25 : vector<1x128xf32>
      %44 = vector.shape_cast %43 : vector<1x128xf32> to vector<1x1x128xf32>
      %cst_17 = arith.constant dense<0.000000e+00> : vector<1xf32>
      %45 = vector.multi_reduction <add>, %44, %cst_17 [1, 2] : vector<1x1x128xf32> to vector<1xf32>
      %46 = vector.shape_cast %45 : vector<1xf32> to vector<1x1x1xf32>
      %47 = vector.extract %46[0, 0, 0] : f32 from vector<1x1x1xf32>
      %48 = arith.addf %42, %47 : f32
      %c0_18 = arith.constant 0 : index
      %49 = memref.load %arg5[%c0_18] : memref<10xf32, #tpu.memory_space<smem>>
      memref.store %48, %arg5[%c0_18] : memref<10xf32, #tpu.memory_space<smem>>
      %c1_19 = arith.constant 1 : index
      %50 = memref.load %arg5[%c1_19] : memref<10xf32, #tpu.memory_space<smem>>
      %51 = vector.shape_cast %29 : vector<1x128xf32> to vector<1x1x128xf32>
      %cst_20 = arith.constant dense<0.000000e+00> : vector<1xf32>
      %52 = vector.multi_reduction <add>, %51, %cst_20 [1, 2] : vector<1x1x128xf32> to vector<1xf32>
      %53 = vector.shape_cast %52 : vector<1xf32> to vector<1x1x1xf32>
      %54 = vector.extract %53[0, 0, 0] : f32 from vector<1x1x1xf32>
      %55 = arith.addf %50, %54 : f32
      %c1_21 = arith.constant 1 : index
      %56 = memref.load %arg5[%c1_21] : memref<10xf32, #tpu.memory_space<smem>>
      memref.store %55, %arg5[%c1_21] : memref<10xf32, #tpu.memory_space<smem>>
      %c2 = arith.constant 2 : index
      %57 = memref.load %arg5[%c2] : memref<10xf32, #tpu.memory_space<smem>>
      %58 = vector.shape_cast %33 : vector<1x128xf32> to vector<1x1x128xf32>
      %cst_22 = arith.constant dense<0.000000e+00> : vector<1xf32>
      %59 = vector.multi_reduction <add>, %58, %cst_22 [1, 2] : vector<1x1x128xf32> to vector<1xf32>
      %60 = vector.shape_cast %59 : vector<1xf32> to vector<1x1x1xf32>
      %61 = vector.extract %60[0, 0, 0] : f32 from vector<1x1x1xf32>
      %62 = arith.addf %57, %61 : f32
      %c2_23 = arith.constant 2 : index
      %63 = memref.load %arg5[%c2_23] : memref<10xf32, #tpu.memory_space<smem>>
      memref.store %62, %arg5[%c2_23] : memref<10xf32, #tpu.memory_space<smem>>
      %c3 = arith.constant 3 : index
      %64 = memref.load %arg5[%c3] : memref<10xf32, #tpu.memory_space<smem>>
      %65 = arith.mulf %29, %29 : vector<1x128xf32>
      %66 = vector.shape_cast %65 : vector<1x128xf32> to vector<1x1x128xf32>
      %cst_24 = arith.constant dense<0.000000e+00> : vector<1xf32>
      %67 = vector.multi_reduction <add>, %66, %cst_24 [1, 2] : vector<1x1x128xf32> to vector<1xf32>
      %68 = vector.shape_cast %67 : vector<1xf32> to vector<1x1x1xf32>
      %69 = vector.extract %68[0, 0, 0] : f32 from vector<1x1x1xf32>
      %70 = arith.addf %64, %69 : f32
      %c3_25 = arith.constant 3 : index
      %71 = memref.load %arg5[%c3_25] : memref<10xf32, #tpu.memory_space<smem>>
      memref.store %70, %arg5[%c3_25] : memref<10xf32, #tpu.memory_space<smem>>
      %c4 = arith.constant 4 : index
      %72 = memref.load %arg5[%c4] : memref<10xf32, #tpu.memory_space<smem>>
      %73 = arith.mulf %33, %33 : vector<1x128xf32>
      %74 = vector.shape_cast %73 : vector<1x128xf32> to vector<1x1x128xf32>
      %cst_26 = arith.constant dense<0.000000e+00> : vector<1xf32>
      %75 = vector.multi_reduction <add>, %74, %cst_26 [1, 2] : vector<1x1x128xf32> to vector<1xf32>
      %76 = vector.shape_cast %75 : vector<1xf32> to vector<1x1x1xf32>
      %77 = vector.extract %76[0, 0, 0] : f32 from vector<1x1x1xf32>
      %78 = arith.addf %72, %77 : f32
      %c4_27 = arith.constant 4 : index
      %79 = memref.load %arg5[%c4_27] : memref<10xf32, #tpu.memory_space<smem>>
      memref.store %78, %arg5[%c4_27] : memref<10xf32, #tpu.memory_space<smem>>
      %c5 = arith.constant 5 : index
      %80 = memref.load %arg5[%c5] : memref<10xf32, #tpu.memory_space<smem>>
      %81 = arith.mulf %29, %33 : vector<1x128xf32>
      %82 = vector.shape_cast %81 : vector<1x128xf32> to vector<1x1x128xf32>
      %cst_28 = arith.constant dense<0.000000e+00> : vector<1xf32>
      %83 = vector.multi_reduction <add>, %82, %cst_28 [1, 2] : vector<1x1x128xf32> to vector<1xf32>
      %84 = vector.shape_cast %83 : vector<1xf32> to vector<1x1x1xf32>
      %85 = vector.extract %84[0, 0, 0] : f32 from vector<1x1x1xf32>
      %86 = arith.addf %80, %85 : f32
      %c5_29 = arith.constant 5 : index
      %87 = memref.load %arg5[%c5_29] : memref<10xf32, #tpu.memory_space<smem>>
      memref.store %86, %arg5[%c5_29] : memref<10xf32, #tpu.memory_space<smem>>
      %c6 = arith.constant 6 : index
      %88 = memref.load %arg5[%c6] : memref<10xf32, #tpu.memory_space<smem>>
      %89 = vector.shape_cast %35 : vector<1x128xf32> to vector<1x1x128xf32>
      %cst_30 = arith.constant dense<0x7F800000> : vector<1xf32>
      %90 = vector.multi_reduction <minimumf>, %89, %cst_30 [1, 2] : vector<1x1x128xf32> to vector<1xf32>
      %91 = vector.shape_cast %90 : vector<1xf32> to vector<1x1x1xf32>
      %92 = vector.extract %91[0, 0, 0] : f32 from vector<1x1x1xf32>
      %93 = arith.minimumf %88, %92 : f32
      %c6_31 = arith.constant 6 : index
      %94 = memref.load %arg5[%c6_31] : memref<10xf32, #tpu.memory_space<smem>>
      memref.store %93, %arg5[%c6_31] : memref<10xf32, #tpu.memory_space<smem>>
      %c7 = arith.constant 7 : index
      %95 = memref.load %arg5[%c7] : memref<10xf32, #tpu.memory_space<smem>>
      %96 = vector.shape_cast %37 : vector<1x128xf32> to vector<1x1x128xf32>
      %cst_32 = arith.constant dense<0x7F800000> : vector<1xf32>
      %97 = vector.multi_reduction <minimumf>, %96, %cst_32 [1, 2] : vector<1x1x128xf32> to vector<1xf32>
      %98 = vector.shape_cast %97 : vector<1xf32> to vector<1x1x1xf32>
      %99 = vector.extract %98[0, 0, 0] : f32 from vector<1x1x1xf32>
      %100 = arith.minimumf %95, %99 : f32
      %c7_33 = arith.constant 7 : index
      %101 = memref.load %arg5[%c7_33] : memref<10xf32, #tpu.memory_space<smem>>
      memref.store %100, %arg5[%c7_33] : memref<10xf32, #tpu.memory_space<smem>>
      %c8 = arith.constant 8 : index
      %102 = memref.load %arg5[%c8] : memref<10xf32, #tpu.memory_space<smem>>
      %103 = vector.shape_cast %39 : vector<1x128xf32> to vector<1x1x128xf32>
      %cst_34 = arith.constant dense<0xFF800000> : vector<1xf32>
      %104 = vector.multi_reduction <maximumf>, %103, %cst_34 [1, 2] : vector<1x1x128xf32> to vector<1xf32>
      %105 = vector.shape_cast %104 : vector<1xf32> to vector<1x1x1xf32>
      %106 = vector.extract %105[0, 0, 0] : f32 from vector<1x1x1xf32>
      %107 = arith.maximumf %102, %106 : f32
      %c8_35 = arith.constant 8 : index
      %108 = memref.load %arg5[%c8_35] : memref<10xf32, #tpu.memory_space<smem>>
      memref.store %107, %arg5[%c8_35] : memref<10xf32, #tpu.memory_space<smem>>
      %c9 = arith.constant 9 : index
      %109 = memref.load %arg5[%c9] : memref<10xf32, #tpu.memory_space<smem>>
      %110 = vector.shape_cast %41 : vector<1x128xf32> to vector<1x1x128xf32>
      %cst_36 = arith.constant dense<0xFF800000> : vector<1xf32>
      %111 = vector.multi_reduction <maximumf>, %110, %cst_36 [1, 2] : vector<1x1x128xf32> to vector<1xf32>
      %112 = vector.shape_cast %111 : vector<1xf32> to vector<1x1x1xf32>
      %113 = vector.extract %112[0, 0, 0] : f32 from vector<1x1x1xf32>
      %114 = arith.maximumf %109, %113 : f32
      %c9_37 = arith.constant 9 : index
      %115 = memref.load %arg5[%c9_37] : memref<10xf32, #tpu.memory_space<smem>>
      memref.store %114, %arg5[%c9_37] : memref<10xf32, #tpu.memory_space<smem>>
    } else {
    }
    %c0_i32_7 = arith.constant 0 : i32
    %10 = arith.cmpi eq, %arg0, %c0_i32_7 : i32
    %11 = arith.extui %10 : i1 to i32
    %c0_i32_8 = arith.constant 0 : i32
    %12 = arith.cmpi ne, %11, %c0_i32_8 : i32
    scf.if %12 {
      %c0_9 = arith.constant 0 : index
      %13 = memref.load %arg5[%c0_9] : memref<10xf32, #tpu.memory_space<smem>>
      %c1_10 = arith.constant 1 : index
      %14 = memref.load %arg5[%c1_10] : memref<10xf32, #tpu.memory_space<smem>>
      %c2 = arith.constant 2 : index
      %15 = memref.load %arg5[%c2] : memref<10xf32, #tpu.memory_space<smem>>
      %c3 = arith.constant 3 : index
      %16 = memref.load %arg5[%c3] : memref<10xf32, #tpu.memory_space<smem>>
      %c4 = arith.constant 4 : index
      %17 = memref.load %arg5[%c4] : memref<10xf32, #tpu.memory_space<smem>>
      %c5 = arith.constant 5 : index
      %18 = memref.load %arg5[%c5] : memref<10xf32, #tpu.memory_space<smem>>
      %19 = arith.mulf %14, %14 : f32
      %cst = arith.constant 3.125000e-02 : f32
      %20 = arith.mulf %19, %cst : f32
      %21 = arith.subf %16, %20 : f32
      %22 = arith.mulf %15, %15 : f32
      %cst_11 = arith.constant 3.125000e-02 : f32
      %23 = arith.mulf %22, %cst_11 : f32
      %24 = arith.subf %17, %23 : f32
      %25 = arith.mulf %14, %15 : f32
      %cst_12 = arith.constant 3.125000e-02 : f32
      %26 = arith.mulf %25, %cst_12 : f32
      %27 = arith.subf %18, %26 : f32
      %28 = arith.mulf %21, %24 : f32
      %29 = math.rsqrt %28 : f32
      %30 = arith.mulf %27, %29 : f32
      %cst_13 = arith.constant 3.125000e-02 : f32
      %31 = arith.mulf %13, %cst_13 : f32
      %c0_14 = arith.constant 0 : index
      %32 = memref.load %arg4[%c0_14] : memref<8xf32, #tpu.memory_space<smem>>
      memref.store %31, %arg4[%c0_14] : memref<8xf32, #tpu.memory_space<smem>>
      %cst_15 = arith.constant 3.125000e-02 : f32
      %33 = arith.mulf %14, %cst_15 : f32
      %34 = arith.addf %3, %33 : f32
      %c1_16 = arith.constant 1 : index
      %35 = memref.load %arg4[%c1_16] : memref<8xf32, #tpu.memory_space<smem>>
      memref.store %34, %arg4[%c1_16] : memref<8xf32, #tpu.memory_space<smem>>
      %cst_17 = arith.constant 3.125000e-02 : f32
      %36 = arith.mulf %15, %cst_17 : f32
      %37 = arith.addf %4, %36 : f32
      %c2_18 = arith.constant 2 : index
      %38 = memref.load %arg4[%c2_18] : memref<8xf32, #tpu.memory_space<smem>>
      memref.store %37, %arg4[%c2_18] : memref<8xf32, #tpu.memory_space<smem>>
      %c6 = arith.constant 6 : index
      %39 = memref.load %arg5[%c6] : memref<10xf32, #tpu.memory_space<smem>>
      %c3_19 = arith.constant 3 : index
      %40 = memref.load %arg4[%c3_19] : memref<8xf32, #tpu.memory_space<smem>>
      memref.store %39, %arg4[%c3_19] : memref<8xf32, #tpu.memory_space<smem>>
      %c7 = arith.constant 7 : index
      %41 = memref.load %arg5[%c7] : memref<10xf32, #tpu.memory_space<smem>>
      %c4_20 = arith.constant 4 : index
      %42 = memref.load %arg4[%c4_20] : memref<8xf32, #tpu.memory_space<smem>>
      memref.store %41, %arg4[%c4_20] : memref<8xf32, #tpu.memory_space<smem>>
      %c8 = arith.constant 8 : index
      %43 = memref.load %arg5[%c8] : memref<10xf32, #tpu.memory_space<smem>>
      %c5_21 = arith.constant 5 : index
      %44 = memref.load %arg4[%c5_21] : memref<8xf32, #tpu.memory_space<smem>>
      memref.store %43, %arg4[%c5_21] : memref<8xf32, #tpu.memory_space<smem>>
      %c9 = arith.constant 9 : index
      %45 = memref.load %arg5[%c9] : memref<10xf32, #tpu.memory_space<smem>>
      %c6_22 = arith.constant 6 : index
      %46 = memref.load %arg4[%c6_22] : memref<8xf32, #tpu.memory_space<smem>>
      memref.store %45, %arg4[%c6_22] : memref<8xf32, #tpu.memory_space<smem>>
      %c7_23 = arith.constant 7 : index
      %47 = memref.load %arg4[%c7_23] : memref<8xf32, #tpu.memory_space<smem>>
      memref.store %30, %arg4[%c7_23] : memref<8xf32, #tpu.memory_space<smem>>
    } else {
    }
    return
  }
  func.func @transform_0(%arg0: i32) -> i32 {
    %c0_i32 = arith.constant 0 : i32
    %c0_i32_0 = arith.constant 0 : i32
    return %c0_i32 : i32
  }
  func.func @transform_1(%arg0: i32) -> (i32, i32) {
    %c0_i32 = arith.constant 0 : i32
    %c0_i32_0 = arith.constant 0 : i32
    return %arg0, %c0_i32 : i32, i32
  }
  func.func @transform_2(%arg0: i32) -> (i32, i32) {
    %c0_i32 = arith.constant 0 : i32
    %c0_i32_0 = arith.constant 0 : i32
    return %arg0, %c0_i32 : i32, i32
  }
  func.func @transform_3(%arg0: i32) -> i32 {
    %c0_i32 = arith.constant 0 : i32
    %c0_i32_0 = arith.constant 0 : i32
    return %c0_i32 : i32
  }
}

</mosaic_0001>

<llo_original>
// kernel: tpu_custom_call.1
$region0: #{tpu_custom_call.1}
  #allocation0 [shape = 'u32[]', space=smem, size = 0x4, offset = 0x4, fixed_abs, tag = 'smem constant byte address 0x4 - core index']
  #allocation1 [shape = 'u32[144,128]{1,0:T(1,128)}', space=vmem, size = 0x12000, scoped, tag = 'internal scratch']
  #allocation2 [shape = 'f32[10]{0:T(128)}', space=smem, size = 0x200, scoped, tag = 'scratch operand']
  %s0 = inlined_call_operand.hbm [shape: f32[2], index: 0, kind: input, shape index: {}]
  %s1 = inlined_call_operand.vmem [shape: f32[1,128], index: 1, kind: input, shape index: {}]
  %s2 = inlined_call_operand.vmem [shape: f32[1,128], index: 2, kind: input, shape index: {}]
  %s3 = inlined_call_operand.hbm [shape: f32[8], index: 3, kind: output, shape index: {}]
  %s4 = sld [smem:[#allocation0]]
  $region34: #{tpu_custom_call.1} parent=0
    _
  %s6 = ssub.s32 1, %s4
  %s7 = scalar_select 0, %s6, %s4
  $region1: #{tpu_custom_call.1} parent=0
    #allocation3 [shape = 'u8[512]{0}', space=smem, size = 0x200, scoped, tag = 'input window, operand 0, single buffered']
    #allocation4 [shape = 's32[1]{0}', space=sflag, size = 0x4, scoped, tag = 'scoped memory for tpu_custom_call.1']
    #allocation5 [shape = 's32[1]{0}', space=sflag, size = 0x4, scoped, tag = 'scoped memory for tpu_custom_call.1']
    #allocation6 [shape = 'u8[512]{0}', space=smem, size = 0x200, scoped, tag = 'output window, operand 0, single buffered']
    %8 = vsyncpa [#allocation4], 0
    %9 = vsyncpa [#allocation5], 0
    // Predicated region
    $region2: #{tpu_custom_call.1} parent=1 // pred_check
      _
    $region3: #{tpu_custom_call.1} parent=1 // pred_check_branch
      %11 = sbr.rel (0) target = $region5
    $region4: #{tpu_custom_call.1} parent=1 // pred_region
      %s13 = ssub.s32 16, 16
      %14 = vsyncadd [#allocation4], %s13
      %17 = dma.hbm_to_smem %s0, 16, [#allocation3], [#allocation4]
    $region5: #{tpu_custom_call.1} parent=1 // pred_fallthru
      _
    // Predicated region
    $region6: #{tpu_custom_call.1} parent=1 // pred_check
      _
    $region7: #{tpu_custom_call.1} parent=1 // pred_check_branch
      %19 = sbr.rel (0) target = $region9
    $region8: #{tpu_custom_call.1} parent=1 // pred_region
      _
    $region9: #{tpu_custom_call.1} parent=1 // pred_fallthru
      _
    // Predicated region
    $region10: #{tpu_custom_call.1} parent=1 // pred_check
      _
    $region11: #{tpu_custom_call.1} parent=1 // pred_check_branch
      %21 = sbr.rel (0) target = $region13
    $region12: #{tpu_custom_call.1} parent=1 // pred_region
      _
    $region13: #{tpu_custom_call.1} parent=1 // pred_fallthru
      _
    // Predicated region
    $region14: #{tpu_custom_call.1} parent=1 // pred_check
      _
    $region15: #{tpu_custom_call.1} parent=1 // pred_check_branch
      %23 = sbr.rel (0) target = $region17
    $region16: #{tpu_custom_call.1} parent=1 // pred_region
      %24 = dma.done [#allocation4], 16
    $region17: #{tpu_custom_call.1} parent=1 // pred_fallthru
      _
    %25 = sfence
    %p26 = scmp.eq.s32.totalorder 0, 0
    // Predicated region
    $region18: #{tpu_custom_call.1} parent=1 // pred_check
      %p27 = pneg %p26
    $region19: #{tpu_custom_call.1} parent=1 // pred_check_branch
      %29 = sbr.rel (%p27) target = $region21
    $region20: #{tpu_custom_call.1} parent=1 // pred_region
      %s30 = scalar_lea.smem [#allocation2], 0
      %31 = sst [smem:[%s30]] 0.0
      %s32 = scalar_lea.smem [#allocation2], 1
      %33 = sst [smem:[%s32]] 0.0
      %s34 = scalar_lea.smem [#allocation2], 2
      %35 = sst [smem:[%s34]] 0.0
      %s36 = scalar_lea.smem [#allocation2], 3
      %37 = sst [smem:[%s36]] 0.0
      %s38 = scalar_lea.smem [#allocation2], 4
      %39 = sst [smem:[%s38]] 0.0
      %s40 = scalar_lea.smem [#allocation2], 5
      %41 = sst [smem:[%s40]] 0.0
      %s42 = scalar_lea.smem [#allocation2], 6
      %43 = sst [smem:[%s42]] inf
      %s44 = scalar_lea.smem [#allocation2], 7
      %45 = sst [smem:[%s44]] inf
      %s46 = scalar_lea.smem [#allocation2], 8
      %47 = sst [smem:[%s46]] -inf
      %s48 = scalar_lea.smem [#allocation2], 9
      %49 = sst [smem:[%s48]] -inf
    $region21: #{tpu_custom_call.1} parent=1 // pred_fallthru
      _
    %s50 = sld [smem:[#allocation3]]
    %s51 = sld [smem:[#allocation3 + $0x1]]
    %v52 = vld [vmem:[%s1] sm:$0x1]
    %v53 = vld [vmem:[%s2] sm:$0x1]
    // Predicated region
    $region22: #{tpu_custom_call.1} parent=1 // pred_check
      %p54 = pneg %p26
    $region23: #{tpu_custom_call.1} parent=1 // pred_check_branch
      %56 = sbr.rel (%p54) target = $region25
    $region24: #{tpu_custom_call.1} parent=1 // pred_region
      %s57 = smul.u32 0, 128
      %v58 = vlaneseq
      %v59 = vshrl.u32 %v58, 7
      %v60 = vmul.u32 %v59, 128
      %v61 = vstv %s57
      %v62 = vadd.s32 %v61, %v60
      %v63 = vlaneseq
      %v64 = vand.u32 %v63, 127
      %v65 = vadd.s32 %v62, %v64
      %vm66 = vcmp.lt.s32.totalorder %v65, 32
      %v67 = vsub.f32 %v52, %v53
      %v68 = vsel %vm66, %v67, 0.0
      %v69 = vstv %s50
      %v70 = vsub.f32 %v52, %v69
      %v71 = vsel %vm66, %v70, 0.0
      %v72 = vstv %s51
      %v73 = vsub.f32 %v53, %v72
      %v74 = vsel %vm66, %v73, 0.0
      %v75 = vsel %vm66, %v52, inf
      %v76 = vsel %vm66, %v53, inf
      %v77 = vsel %vm66, %v52, -inf
      %v78 = vsel %vm66, %v53, -inf
      %s79 = sld [smem:[#allocation2]]
      %v80 = vmul.f32 %v68, %v68
      %vm81 = vcmask 1040384
      %v82 = vsel %vm81, %v80, 0.0
      %83 = vadd.xlane.f32.xlu0 %v82
      %v84 = vpop.xlane.xlu0 %83
      %v85 = vrot.slane %v84, 4
      %v86 = vadd.f32 %v84, %v85
      %v87 = vrot.slane %v86, 2
      %v88 = vadd.f32 %v86, %v87
      %v89 = vrot.slane %v88, 1
      %v90 = vadd.f32 %v88, %v89
      %s91 = vtos %v90
      %s92 = sadd.f32 %s79, %s91
      %s93 = scalar_lea.smem [#allocation2], 0
      %94 = sst [smem:[%s93]] %s92
      %s95 = sld [smem:[#allocation2 + $0x1]]
      %v96 = vsel %vm81, %v71, 0.0
      %97 = vadd.xlane.f32.xlu0 %v96
      %v98 = vpop.xlane.xlu0 %97
      %v99 = vrot.slane %v98, 4
      %v100 = vadd.f32 %v98, %v99
      %v101 = vrot.slane %v100, 2
      %v102 = vadd.f32 %v100, %v101
      %v103 = vrot.slane %v102, 1
      %v104 = vadd.f32 %v102, %v103
      %s105 = vtos %v104
      %s106 = sadd.f32 %s95, %s105
      %s107 = scalar_lea.smem [#allocation2], 1
      %108 = sst [smem:[%s107]] %s106
      %s109 = sld [smem:[#allocation2 + $0x2]]
      %v110 = vsel %vm81, %v74, 0.0
      %111 = vadd.xlane.f32.xlu0 %v110
      %v112 = vpop.xlane.xlu0 %111
      %v113 = vrot.slane %v112, 4
      %v114 = vadd.f32 %v112, %v113
      %v115 = vrot.slane %v114, 2
      %v116 = vadd.f32 %v114, %v115
      %v117 = vrot.slane %v116, 1
      %v118 = vadd.f32 %v116, %v117
      %s119 = vtos %v118
      %s120 = sadd.f32 %s109, %s119
      %s121 = scalar_lea.smem [#allocation2], 2
      %122 = sst [smem:[%s121]] %s120
      %s123 = sld [smem:[#allocation2 + $0x3]]
      %v124 = vmul.f32 %v71, %v71
      %v125 = vsel %vm81, %v124, 0.0
      %126 = vadd.xlane.f32.xlu0 %v125
      %v127 = vpop.xlane.xlu0 %126
      %v128 = vrot.slane %v127, 4
      %v129 = vadd.f32 %v127, %v128
      %v130 = vrot.slane %v129, 2
      %v131 = vadd.f32 %v129, %v130
      %v132 = vrot.slane %v131, 1
      %v133 = vadd.f32 %v131, %v132
      %s134 = vtos %v133
      %s135 = sadd.f32 %s123, %s134
      %s136 = scalar_lea.smem [#allocation2], 3
      %137 = sst [smem:[%s136]] %s135
      %s138 = sld [smem:[#allocation2 + $0x4]]
      %v139 = vmul.f32 %v74, %v74
      %v140 = vsel %vm81, %v139, 0.0
      %141 = vadd.xlane.f32.xlu0 %v140
      %v142 = vpop.xlane.xlu0 %141
      %v143 = vrot.slane %v142, 4
      %v144 = vadd.f32 %v142, %v143
      %v145 = vrot.slane %v144, 2
      %v146 = vadd.f32 %v144, %v145
      %v147 = vrot.slane %v146, 1
      %v148 = vadd.f32 %v146, %v147
      %s149 = vtos %v148
      %s150 = sadd.f32 %s138, %s149
      %s151 = scalar_lea.smem [#allocation2], 4
      %152 = sst [smem:[%s151]] %s150
      %s153 = sld [smem:[#allocation2 + $0x5]]
      %v154 = vmul.f32 %v71, %v74
      %v155 = vsel %vm81, %v154, 0.0
      %156 = vadd.xlane.f32.xlu0 %v155
      %v157 = vpop.xlane.xlu0 %156
      %v158 = vrot.slane %v157, 4
      %v159 = vadd.f32 %v157, %v158
      %v160 = vrot.slane %v159, 2
      %v161 = vadd.f32 %v159, %v160
      %v162 = vrot.slane %v161, 1
      %v163 = vadd.f32 %v161, %v162
      %s164 = vtos %v163
      %s165 = sadd.f32 %s153, %s164
      %s166 = scalar_lea.smem [#allocation2], 5
      %167 = sst [smem:[%s166]] %s165
      %s168 = sld [smem:[#allocation2 + $0x6]]
      %v169 = vsel %vm81, %v75, inf
      %170 = vmin.xlane.f32.xlu0 %v169
      %v171 = vpop.xlane.xlu0 %170
      %v172 = vrot.slane %v171, 4
      %v173 = vmin.f32 %v171, %v172
      %v174 = vrot.slane %v173, 2
      %v175 = vmin.f32 %v173, %v174
      %v176 = vrot.slane %v175, 1
      %v177 = vmin.f32 %v175, %v176
      %s178 = vtos %v177
      %s179 = smin.f32 %s168, %s178
      %s180 = scalar_lea.smem [#allocation2], 6
      %181 = sst [smem:[%s180]] %s179
      %s182 = sld [smem:[#allocation2 + $0x7]]
      %v183 = vsel %vm81, %v76, inf
      %184 = vmin.xlane.f32.xlu0 %v183
      %v185 = vpop.xlane.xlu0 %184
      %v186 = vrot.slane %v185, 4
      %v187 = vmin.f32 %v185, %v186
      %v188 = vrot.slane %v187, 2
      %v189 = vmin.f32 %v187, %v188
      %v190 = vrot.slane %v189, 1
      %v191 = vmin.f32 %v189, %v190
      %s192 = vtos %v191
      %s193 = smin.f32 %s182, %s192
      %s194 = scalar_lea.smem [#allocation2], 7
      %195 = sst [smem:[%s194]] %s193
      %s196 = sld [smem:[#allocation2 + $0x8]]
      %v197 = vsel %vm81, %v77, -inf
      %198 = vmax.xlane.f32.xlu0 %v197
      %v199 = vpop.xlane.xlu0 %198
      %v200 = vrot.slane %v199, 4
      %v201 = vmax.f32 %v199, %v200
      %v202 = vrot.slane %v201, 2
      %v203 = vmax.f32 %v201, %v202
      %v204 = vrot.slane %v203, 1
      %v205 = vmax.f32 %v203, %v204
      %s206 = vtos %v205
      %s207 = smax.f32 %s196, %s206
      %s208 = scalar_lea.smem [#allocation2], 8
      %209 = sst [smem:[%s208]] %s207
      %s210 = sld [smem:[#allocation2 + $0x9]]
      %v211 = vsel %vm81, %v78, -inf
      %212 = vmax.xlane.f32.xlu0 %v211
      %v213 = vpop.xlane.xlu0 %212
      %v214 = vrot.slane %v213, 4
      %v215 = vmax.f32 %v213, %v214
      %v216 = vrot.slane %v215, 2
      %v217 = vmax.f32 %v215, %v216
      %v218 = vrot.slane %v217, 1
      %v219 = vmax.f32 %v217, %v218
      %s220 = vtos %v219
      %s221 = smax.f32 %s210, %s220
      %s222 = scalar_lea.smem [#allocation2], 9
      %223 = sst [smem:[%s222]] %s221
      %s224 = sld [smem:[#allocation2]]
      %s225 = sld [smem:[#allocation2 + $0x1]]
      %s226 = sld [smem:[#allocation2 + $0x2]]
      %s227 = sld [smem:[#allocation2 + $0x3]]
      %s228 = sld [smem:[#allocation2 + $0x4]]
      %s229 = sld [smem:[#allocation2 + $0x5]]
      %s230 = smul.f32 %s225, %s225
      %s231 = smul.f32 %s230, 0.03125
      %s232 = ssub.f32 %s227, %s231
      %s233 = smul.f32 %s226, %s226
      %s234 = smul.f32 %s233, 0.03125
      %s235 = ssub.f32 %s228, %s234
      %s236 = smul.f32 %s225, %s226
      %s237 = smul.f32 %s236, 0.03125
      %s238 = ssub.f32 %s229, %s237
      %s239 = smul.f32 %s232, %s235
      %v240 = vstv %s239
      %v241 = vrsqrt.pop %v240
      %s242 = vtos %v241
      %s243 = smul.f32 %s238, %s242
      %s244 = smul.f32 %s224, 0.03125
      %s245 = scalar_lea.smem [#allocation6], 0
      %246 = sst [smem:[%s245]] %s244
      %s247 = smul.f32 %s225, 0.03125
      %s248 = sadd.f32 %s50, %s247
      %s249 = scalar_lea.smem [#allocation6], 1
      %250 = sst [smem:[%s249]] %s248
      %s251 = smul.f32 %s226, 0.03125
      %s252 = sadd.f32 %s51, %s251
      %s253 = scalar_lea.smem [#allocation6], 2
      %254 = sst [smem:[%s253]] %s252
      %s255 = sld [smem:[#allocation2 + $0x6]]
      %s256 = scalar_lea.smem [#allocation6], 3
      %257 = sst [smem:[%s256]] %s255
      %s258 = sld [smem:[#allocation2 + $0x7]]
      %s259 = scalar_lea.smem [#allocation6], 4
      %260 = sst [smem:[%s259]] %s258
      %s261 = sld [smem:[#allocation2 + $0x8]]
      %s262 = scalar_lea.smem [#allocation6], 5
      %263 = sst [smem:[%s262]] %s261
      %s264 = sld [smem:[#allocation2 + $0x9]]
      %s265 = scalar_lea.smem [#allocation6], 6
      %266 = sst [smem:[%s265]] %s264
      %s267 = scalar_lea.smem [#allocation6], 7
      %268 = sst [smem:[%s267]] %s243
    $region25: #{tpu_custom_call.1} parent=1 // pred_fallthru
      _
    // Predicated region
    $region26: #{tpu_custom_call.1} parent=1 // pred_check
      _
    $region27: #{tpu_custom_call.1} parent=1 // pred_check_branch
      %270 = sbr.rel (0) target = $region29
    $region28: #{tpu_custom_call.1} parent=1 // pred_region
      %s272 = ssub.s32 16, 16
      %273 = vsyncadd [#allocation5], %s272
      %276 = dma.smem_to_hbm [#allocation6], 16, %s3, [#allocation5]
    $region29: #{tpu_custom_call.1} parent=1 // pred_fallthru
      _
    // Predicated region
    $region30: #{tpu_custom_call.1} parent=1 // pred_check
      _
    $region31: #{tpu_custom_call.1} parent=1 // pred_check_branch
      %278 = sbr.rel (0) target = $region33
    $region32: #{tpu_custom_call.1} parent=1 // pred_region
      %279 = dma.done [#allocation5], 16
    $region33: #{tpu_custom_call.1} parent=1 // pred_fallthru
      _
    %280 = sfence
    %281 = vsyncpa [#allocation4], 1
    %282 = vsyncpa [#allocation5], 1

</llo_original>
